<compile_context>
chip_gen: v6e
topology: v6e:2x2x1
jax: 0.10.0
libtpu: 0.0.40
codegen_flags: <defaults>
</compile_context>

<pallas_src>
import functools

import jax
import jax.numpy as jnp
from jax.experimental import pallas as pl
from jax.experimental.pallas import tpu as pltpu


def _clamp_temp_kernel(temp_ref, temp_out_ref):
    # with torch.no_grad(): self.temp.clamp_(0.001, 0.5)
    # Two scalar-ALU ops on a 4-byte SMEM value; NaN propagates through
    # maximum/minimum exactly as torch.clamp_ does.
    t = temp_ref[0]
    temp_out_ref[0] = jnp.minimum(
        jnp.maximum(t, jnp.float32(0.001)), jnp.float32(0.5)
    )


_clamp_temp = pl.pallas_call(
    _clamp_temp_kernel,
    out_shape=jax.ShapeDtypeStruct((1,), jnp.float32),
    in_specs=[pl.BlockSpec(memory_space=pltpu.MemorySpace.SMEM)],
    out_specs=pl.BlockSpec(memory_space=pltpu.MemorySpace.SMEM),
    input_output_aliases={0: 0},  # in-place clamp_ inside the custom call
    cost_estimate=pl.CostEstimate(flops=2, transcendentals=0, bytes_accessed=8),
)


@functools.partial(jax.jit, donate_argnums=0)
def _iladt_forward(temp_1d):
    """Clamp the f32[1] temperature in place (donated + aliased) and return it."""
    return _clamp_temp(temp_1d)


class ILADTLoss:
    """JAX/Pallas port of the (stub) PyTorch ILADTLoss module."""

    def __init__(self, dim=64, gamma=0.007):
        self.dim = dim
        # nn.Parameter(gamma * torch.ones([])) -> scalar parameter, staged once
        # as a 1-D f32[1] array (SMEM-padding-friendly; no per-call reshape).
        self.temp = jnp.full((1,), gamma, dtype=jnp.float32)

    def __call__(self, user_embeddings, item_embeddings, image_embeddings,
                 text_embeddings, user_id, item_id):
        # `ids = item_id.detach().cpu().numpy()` in the reference has no effect
        # on the returned loss; embeddings are likewise unused in the released
        # code path.
        # NOTE: the clamp is idempotent — in a real training loop it only needs
        # to run after an optimizer step mutates temp; kept per-call here to
        # match the reference forward semantics exactly.
        self.temp = _iladt_forward(self.temp)
        # TODO(synk): the actual ILA / DT contrastive loss terms are not present
        # in the reference module ("code will be released after paper
        # published"), so the returned loss is the stub's `loss + dt_loss == 0`,
        # emitted as a host constant (no device allocation / readback).
        return 0.0


if __name__ == "__main__":
    key = jax.random.PRNGKey(0)
    k_u, k_i, k_im, k_tx, k_uid, k_iid = jax.random.split(key, 6)

    batch, dim = 8, 32
    user_embeddings = jax.random.normal(k_u, (batch, dim), dtype=jnp.float32)
    item_embeddings = jax.random.normal(k_i, (batch, dim), dtype=jnp.float32)
    image_embeddings = jax.random.normal(k_im, (batch, dim), dtype=jnp.float32)
    text_embeddings = jax.random.normal(k_tx, (batch, dim), dtype=jnp.float32)
    user_id = jax.random.randint(k_uid, (batch,), 0, 100, dtype=jnp.int32)
    item_id = jax.random.randint(k_iid, (batch,), 0, 100, dtype=jnp.int32)

    module = ILADTLoss(dim=dim, gamma=0.007)
    loss = module(user_embeddings, item_embeddings, image_embeddings,
                  text_embeddings, user_id, item_id)
    new_temp = jax.block_until_ready(module.temp)

    # verify exact forward semantics: loss == 0, temp clamped to [0.001, 0.5]
    assert loss == 0.0
    t = float(new_temp[0])
    assert 0.001 <= t <= 0.5
    assert abs(t - 0.007) < 1e-7  # 0.007 already inside the clamp range

    # also check the clamp actually clamps out-of-range values
    hi = ILADTLoss(dim=dim, gamma=5.0)
    hi(user_embeddings, item_embeddings, image_embeddings, text_embeddings,
       user_id, item_id)
    assert abs(float(jax.block_until_ready(hi.temp)[0]) - 0.5) < 1e-7

    lo = ILADTLoss(dim=dim, gamma=-1.0)
    lo(user_embeddings, item_embeddings, image_embeddings, text_embeddings,
       user_id, item_id)
    assert abs(float(jax.block_until_ready(lo.temp)[0]) - 0.001) < 1e-7

    print("KERNEL_OK")
</pallas_src>

<mosaic_0001>
module attributes {stable_mosaic.version = 11 : i64} {
  func.func @_clamp_temp_kernel(%arg0: memref<1xf32, #tpu.memory_space<smem>>, %arg1: memref<1xf32, #tpu.memory_space<smem>>) attributes {dimension_semantics = [], scalar_prefetch = 0 : i64, scratch_operands = 0 : i64, tpu.core_type = #tpu.core_type<tc>} {
    %c0 = arith.constant 0 : index
    %0 = memref.load %arg0[%c0] : memref<1xf32, #tpu.memory_space<smem>>
    %cst = arith.constant 1.000000e-03 : f32
    %1 = arith.maximumf %0, %cst : f32
    %cst_0 = arith.constant 5.000000e-01 : f32
    %2 = arith.minimumf %1, %cst_0 : f32
    %c0_1 = arith.constant 0 : index
    %3 = memref.load %arg1[%c0_1] : memref<1xf32, #tpu.memory_space<smem>>
    memref.store %2, %arg1[%c0_1] : memref<1xf32, #tpu.memory_space<smem>>
    return
  }
}

</mosaic_0001>

<llo_original>
// kernel: _iladt_forward.1
$region0: #{_iladt_forward.1}
  #allocation0 [shape = 'u32[]', space=smem, size = 0x4, offset = 0x4, fixed_abs, tag = 'smem constant byte address 0x4 - core index']
  #allocation1 [shape = 'u32[144,128]{1,0:T(1,128)}', space=vmem, size = 0x12000, scoped, tag = 'internal scratch']
  #allocation2 [shape = 'f32[1]{0:T(128)S(6)}', space=smem, size = 0x200, scoped, tag = 'scoped memory for _iladt_forward.1']
  %s0 = inlined_call_operand.<no memory space> [shape: f32[1], index: 0, kind: input, shape index: {}, may-alias: {0,1}]
  %s1 = inlined_call_operand.hbm [shape: f32[1], index: 1, kind: output, shape index: {}, may-alias: {0,1}]
  %s2 = sld [smem:[#allocation0]]
  $region14: #{_iladt_forward.1} parent=0
    _
  %s4 = ssub.s32 1, %s2
  %s5 = scalar_select 0, %s4, %s2
  %6 = sst [smem:[#allocation2]] %s0
  $region1: #{_iladt_forward.1} parent=0
    #allocation3 [shape = 'u8[512]{0}', space=smem, size = 0x200, scoped, tag = 'output window, operand 0, single buffered']
    #allocation4 [shape = 's32[1]{0}', space=sflag, size = 0x4, scoped, tag = 'scoped memory for _iladt_forward.1']
    %7 = vsyncpa [#allocation4], 0
    // Predicated region
    $region2: #{_iladt_forward.1} parent=1 // pred_check
      _
    $region3: #{_iladt_forward.1} parent=1 // pred_check_branch
      %9 = sbr.rel (0) target = $region5
    $region4: #{_iladt_forward.1} parent=1 // pred_region
      _
    $region5: #{_iladt_forward.1} parent=1 // pred_fallthru
      _
    %s10 = sld [smem:[#allocation2]]
    %s11 = smax.f32 %s10, 0.001
    %s12 = smin.f32 %s11, 0.5
    %s13 = scalar_lea.smem [#allocation3], 0
    %14 = sst [smem:[%s13]] %s12
    // Predicated region
    $region6: #{_iladt_forward.1} parent=1 // pred_check
      _
    $region7: #{_iladt_forward.1} parent=1 // pred_check_branch
      %16 = sbr.rel (0) target = $region9
    $region8: #{_iladt_forward.1} parent=1 // pred_region
      %s18 = ssub.s32 16, 16
      %19 = vsyncadd [#allocation4], %s18
      %22 = dma.smem_to_hbm [#allocation3], 16, %s1, [#allocation4]
    $region9: #{_iladt_forward.1} parent=1 // pred_fallthru
      _
    // Predicated region
    $region10: #{_iladt_forward.1} parent=1 // pred_check
      _
    $region11: #{_iladt_forward.1} parent=1 // pred_check_branch
      %24 = sbr.rel (0) target = $region13
    $region12: #{_iladt_forward.1} parent=1 // pred_region
      %25 = dma.done [#allocation4], 16
    $region13: #{_iladt_forward.1} parent=1 // pred_fallthru
      _
    %26 = sfence
    %27 = vsyncpa [#allocation4], 1

</llo_original>
